<compile_context>
chip_gen: v6e
topology: v6e:2x2x1
jax: 0.10.0
libtpu: 0.0.40
codegen_flags: <defaults>
</compile_context>

<pallas_src>
import jax
import jax.numpy as jnp
from jax.experimental import pallas as pl
from jax.experimental.pallas import tpu as pltpu


def dqn_kernel(x_ref, w1_ref, b1_ref, w2_ref, b2_ref, o_ref):
    # bf16 cast of the activations happens in-kernel (saves a wrapper pass).
    x = x_ref[...].astype(jnp.bfloat16)
    # Layer 1: bf16 operands on the MXU, f32 accumulation, f32 bias + ReLU.
    h = jnp.dot(x, w1_ref[...], preferred_element_type=jnp.float32)
    h = jnp.maximum(h + b1_ref[...], 0.0)
    # Layer 2: cast hidden to bf16 for the MXU, accumulate in f32.
    out = jnp.dot(h.astype(jnp.bfloat16), w2_ref[...],
                  preferred_element_type=jnp.float32)
    o_ref[...] = (out + b2_ref[...]).astype(o_ref.dtype)


def prepare_params(w1, b1, w2, b2):
    """One-time parameter prep (hoisted out of the per-call forward path):
    bf16 matmul weights, f32 row-vector biases.  No padding of any kind."""
    w1b = jnp.asarray(w1).astype(jnp.bfloat16)
    b1f = jnp.asarray(b1, jnp.float32).reshape(1, -1)
    w2b = jnp.asarray(w2).astype(jnp.bfloat16)
    b2f = jnp.asarray(b2, jnp.float32).reshape(1, -1)
    return w1b, b1f, w2b, b2f


def dqn_forward(x, w1b, b1f, w2b, b2f, *, block_b=2048):
    """x: [B, n_obs] f32 ; w1b: [n_obs, 128] bf16 ; b1f: [1, 128] f32 ;
    w2b: [128, n_actions] bf16 ; b2f: [1, n_actions] f32  ->  [B, n_actions] f32."""
    B, n_obs = x.shape
    n_obs_w, hidden = w1b.shape
    hidden2, n_actions = w2b.shape
    assert n_obs == n_obs_w and hidden == hidden2

    if B <= block_b:
        # Action-selection sized batches: single invocation, all operands
        # resident in VMEM, no grid/pipeline bookkeeping, no padding, no slice.
        return pl.pallas_call(
            dqn_kernel,
            out_shape=jax.ShapeDtypeStruct((B, n_actions), jnp.float32),
            in_specs=[pl.BlockSpec(memory_space=pltpu.MemorySpace.VMEM)] * 5,
            out_specs=pl.BlockSpec(memory_space=pltpu.MemorySpace.VMEM),
        )(x, w1b, b1f, w2b, b2f)

    # Replay-buffer sized batches: tile only the batch axis with large tiles so
    # the per-grid-step overhead is amortized; weights/biases stay resident
    # (same block every step).  pl.cdiv grid -> Pallas masks the ragged last
    # block, so no explicit batch-pad copy.  "parallel" lets v7x's two
    # TensorCores split the grid.
    tb = block_b
    return pl.pallas_call(
        dqn_kernel,
        out_shape=jax.ShapeDtypeStruct((B, n_actions), jnp.float32),
        grid=(pl.cdiv(B, tb),),
        in_specs=[
            pl.BlockSpec((tb, n_obs), lambda i: (i, 0)),
            pl.BlockSpec((n_obs, hidden), lambda i: (0, 0)),
            pl.BlockSpec((1, hidden), lambda i: (0, 0)),
            pl.BlockSpec((hidden, n_actions), lambda i: (0, 0)),
            pl.BlockSpec((1, n_actions), lambda i: (0, 0)),
        ],
        out_specs=pl.BlockSpec((tb, n_actions), lambda i: (i, 0)),
        compiler_params=pltpu.CompilerParams(
            dimension_semantics=("parallel",)),
    )(x, w1b, b1f, w2b, b2f)


def init_params(key, n_observations, n_actions, hidden=128):
    """torch.nn.Linear default init (U[-1/sqrt(fan_in), 1/sqrt(fan_in)]).
    Weights stored as [in, out] (transposed vs torch's [out, in])."""
    k1, k2, k3, k4 = jax.random.split(key, 4)
    bound1 = 1.0 / jnp.sqrt(jnp.float32(n_observations))
    bound2 = 1.0 / jnp.sqrt(jnp.float32(hidden))
    w1 = jax.random.uniform(k1, (n_observations, hidden), jnp.float32, -bound1, bound1)
    b1 = jax.random.uniform(k2, (1, hidden), jnp.float32, -bound1, bound1)
    w2 = jax.random.uniform(k3, (hidden, n_actions), jnp.float32, -bound2, bound2)
    b2 = jax.random.uniform(k4, (1, n_actions), jnp.float32, -bound2, bound2)
    return w1, b1, w2, b2


def dqn_reference_bf16(x, w1, b1, w2, b2):
    """Pure-JAX reference matching the kernel numerics (bf16 operands, f32 acc)."""
    h = jnp.dot(x.astype(jnp.bfloat16), w1.astype(jnp.bfloat16),
                preferred_element_type=jnp.float32)
    h = jnp.maximum(h + b1.reshape(1, -1), 0.0)
    out = jnp.dot(h.astype(jnp.bfloat16), w2.astype(jnp.bfloat16),
                  preferred_element_type=jnp.float32)
    return out + b2.reshape(1, -1)


def dqn_reference_f32(x, w1, b1, w2, b2):
    h = jnp.maximum(x @ w1 + b1.reshape(1, -1), 0.0)
    return h @ w2 + b2.reshape(1, -1)


if __name__ == "__main__":
    key = jax.random.PRNGKey(0)
    B, n_observations, n_actions = 8, 32, 4

    kx, kp, kx2 = jax.random.split(key, 3)
    x = jax.random.normal(kx, (B, n_observations), jnp.float32)
    w1, b1, w2, b2 = init_params(kp, n_observations, n_actions)

    # One-time param prep (hoisted out of the forward path).
    w1b, b1f, w2b, b2f = prepare_params(w1, b1, w2, b2)

    # Small-batch (no-grid, unpadded) action-selection path.
    out = jax.block_until_ready(dqn_forward(x, w1b, b1f, w2b, b2f))
    assert out.shape == (B, n_actions)
    ref_bf16 = dqn_reference_bf16(x, w1, b1, w2, b2)
    ref_f32 = dqn_reference_f32(x, w1, b1, w2, b2)
    assert jnp.allclose(out, ref_bf16, atol=1e-3, rtol=1e-3), "mismatch vs bf16 reference"
    assert jnp.allclose(out, ref_f32, atol=2e-2, rtol=2e-2), "mismatch vs f32 reference"

    # Replay-buffer sized batch exercises the tiled ("parallel") path with a
    # ragged last block (5000 rows -> grid of 3 with tb=2048; last block 904).
    Bl = 5000
    xl = jax.random.normal(kx2, (Bl, n_observations), jnp.float32)
    out_l = jax.block_until_ready(dqn_forward(xl, w1b, b1f, w2b, b2f))
    assert out_l.shape == (Bl, n_actions)
    ref_l = dqn_reference_bf16(xl, w1, b1, w2, b2)
    assert jnp.allclose(out_l, ref_l, atol=1e-3, rtol=1e-3), "tiled path mismatch"

    print("KERNEL_OK")
</pallas_src>

<mosaic_0001>
module attributes {stable_mosaic.version = 11 : i64} {
  func.func @dqn_kernel(%arg0: memref<8x32xf32, #tpu.memory_space<vmem>>, %arg1: memref<32x128xbf16, #tpu.memory_space<vmem>>, %arg2: memref<1x128xf32, #tpu.memory_space<vmem>>, %arg3: memref<128x4xbf16, #tpu.memory_space<vmem>>, %arg4: memref<1x4xf32, #tpu.memory_space<vmem>>, %arg5: memref<8x4xf32, #tpu.memory_space<vmem>>) attributes {dimension_semantics = [], scalar_prefetch = 0 : i64, scratch_operands = 0 : i64, tpu.core_type = #tpu.core_type<tc>} {
    %c0 = arith.constant 0 : index
    %c0_0 = arith.constant 0 : index
    %0 = vector.load %arg0[%c0, %c0_0] : memref<8x32xf32, #tpu.memory_space<vmem>>, vector<8x32xf32>
    %1 = arith.truncf %0 : vector<8x32xf32> to vector<8x32xbf16>
    %c0_1 = arith.constant 0 : index
    %c0_2 = arith.constant 0 : index
    %2 = vector.load %arg1[%c0_1, %c0_2] : memref<32x128xbf16, #tpu.memory_space<vmem>>, vector<32x128xbf16>
    %cst = arith.constant dense<0.000000e+00> : vector<8x128xf32>
    %3 = tpu.matmul %1, %2, %cst {dimension_numbers = #tpu.dot_dimension_numbers<[1], [0], [0], [1], [0, 0, 1, 1], [], []>} : vector<8x32xbf16>, vector<32x128xbf16>, vector<8x128xf32> -> vector<8x128xf32>
    %c0_3 = arith.constant 0 : index
    %c0_4 = arith.constant 0 : index
    %4 = vector.load %arg2[%c0_3, %c0_4] : memref<1x128xf32, #tpu.memory_space<vmem>>, vector<1x128xf32>
    %5 = vector.broadcast %4 : vector<1x128xf32> to vector<8x128xf32>
    %6 = arith.addf %3, %5 : vector<8x128xf32>
    %cst_5 = arith.constant 0.000000e+00 : f32
    %7 = vector.broadcast %cst_5 : f32 to vector<8x128xf32>
    %8 = arith.maximumf %6, %7 : vector<8x128xf32>
    %9 = arith.truncf %8 : vector<8x128xf32> to vector<8x128xbf16>
    %c0_6 = arith.constant 0 : index
    %c0_7 = arith.constant 0 : index
    %10 = vector.load %arg3[%c0_6, %c0_7] : memref<128x4xbf16, #tpu.memory_space<vmem>>, vector<128x4xbf16>
    %cst_8 = arith.constant dense<0.000000e+00> : vector<8x4xf32>
    %11 = tpu.matmul %9, %10, %cst_8 {dimension_numbers = #tpu.dot_dimension_numbers<[1], [0], [0], [1], [0, 0, 1, 1], [], []>} : vector<8x128xbf16>, vector<128x4xbf16>, vector<8x4xf32> -> vector<8x4xf32>
    %c0_9 = arith.constant 0 : index
    %c0_10 = arith.constant 0 : index
    %12 = vector.load %arg4[%c0_9, %c0_10] : memref<1x4xf32, #tpu.memory_space<vmem>>, vector<1x4xf32>
    %13 = vector.broadcast %12 : vector<1x4xf32> to vector<8x4xf32>
    %14 = arith.addf %11, %13 : vector<8x4xf32>
    %c0_11 = arith.constant 0 : index
    %c0_12 = arith.constant 0 : index
    %15 = vector.load %arg5[%c0_11, %c0_12] : memref<8x4xf32, #tpu.memory_space<vmem>>, vector<8x4xf32>
    tpu.vector_store %arg5[%c0_11, %c0_12], %14 {strides = array<i32>} : memref<8x4xf32, #tpu.memory_space<vmem>>, vector<8x4xf32>,
    return
  }
}

</mosaic_0001>

<llo_original>
// kernel: tpu_custom_call.1
$region0: #{tpu_custom_call.1}
  #allocation0 [shape = 'u32[]', space=smem, size = 0x4, offset = 0x4, fixed_abs, tag = 'smem constant byte address 0x4 - core index']
  #allocation1 [shape = 'u32[144,128]{1,0:T(1,128)}', space=vmem, size = 0x12000, scoped, tag = 'internal scratch']
  %s0 = inlined_call_operand.vmem [shape: f32[8,32], index: 0, kind: input, shape index: {}]
  %s1 = inlined_call_operand.vmem [shape: bf16[32,128], index: 1, kind: input, shape index: {}]
  %s2 = inlined_call_operand.vmem [shape: f32[1,128], index: 2, kind: input, shape index: {}]
  %s3 = inlined_call_operand.vmem [shape: bf16[128,4], index: 3, kind: input, shape index: {}]
  %s4 = inlined_call_operand.vmem [shape: f32[1,4], index: 4, kind: input, shape index: {}]
  %s5 = inlined_call_operand.vmem [shape: f32[8,4], index: 5, kind: output, shape index: {}]
  %s6 = sld [smem:[#allocation0]]
  $region30: #{tpu_custom_call.1} parent=0
    _
  %s8 = ssub.s32 1, %s6
  %s9 = scalar_select 0, %s8, %s6
  // Predicated region
  $region2: #{tpu_custom_call.1} parent=0 // pred_check
    _
  $region3: #{tpu_custom_call.1} parent=0 // pred_check_branch
    %11 = sbr.rel (0) target = $region5
  $region4: #{tpu_custom_call.1} parent=0 // pred_region
    _
  $region5: #{tpu_custom_call.1} parent=0 // pred_fallthru
    _
  // Predicated region
  $region6: #{tpu_custom_call.1} parent=0 // pred_check
    _
  $region7: #{tpu_custom_call.1} parent=0 // pred_check_branch
    %13 = sbr.rel (0) target = $region9
  $region8: #{tpu_custom_call.1} parent=0 // pred_region
    _
  $region9: #{tpu_custom_call.1} parent=0 // pred_fallthru
    _
  // Predicated region
  $region10: #{tpu_custom_call.1} parent=0 // pred_check
    _
  $region11: #{tpu_custom_call.1} parent=0 // pred_check_branch
    %15 = sbr.rel (0) target = $region13
  $region12: #{tpu_custom_call.1} parent=0 // pred_region
    _
  $region13: #{tpu_custom_call.1} parent=0 // pred_fallthru
    _
  // Predicated region
  $region14: #{tpu_custom_call.1} parent=0 // pred_check
    _
  $region15: #{tpu_custom_call.1} parent=0 // pred_check_branch
    %17 = sbr.rel (0) target = $region17
  $region16: #{tpu_custom_call.1} parent=0 // pred_region
    _
  $region17: #{tpu_custom_call.1} parent=0 // pred_fallthru
    _
  // Predicated region
  $region18: #{tpu_custom_call.1} parent=0 // pred_check
    _
  $region19: #{tpu_custom_call.1} parent=0 // pred_check_branch
    %19 = sbr.rel (0) target = $region21
  $region20: #{tpu_custom_call.1} parent=0 // pred_region
    _
  $region21: #{tpu_custom_call.1} parent=0 // pred_fallthru
    _
  %v21 = vld [vmem:[%s0] sm:$0xff]
  %v22 = vpack.c.bf16 %v21, %v21
  %v23 = vld [vmem:[%s1] sm:$0xf]
  %v24 = vld [vmem:[%s1 + $0x4] sm:$0xf]
  %v25 = vld [vmem:[%s1 + $0x8] sm:$0xf]
  %v26 = vld [vmem:[%s1 + $0xc] sm:$0xf]
  %v27 = vld [vmem:[%s2] sm:$0x1]
  %v29 = vlaneseq
  %v30 = vshrl.u32 %v29, 7
  %v31 = vsub.s32 0, %v30
  %v32 = vrot.slane %v27, %v31
  %v38 = vunpack.c.l.b16 %v23
  %v39 = vunpack.c.l.b16 %v24
  %v40 = vunpack.c.l.b16 %v25
  %v41 = vunpack.c.l.b16 %v26
  %v42 = vpack.c.b16 %v39, %v38
  %v43 = vpack.c.b16 %v41, %v40
  %vm46 = vcmask 261120
  %v48 = vsel %vm46, %v22, 0
  %50 = vmatprep.subr.bf16.mxu0 0
  %51 = vmatpush1.bf16.msra.mxu0 0
  %52 = vmatprep.subr.bf16.mxu0 0
  %53 = vmatpush1.bf16.msra.mxu0 0
  %54 = vmatprep.subr.bf16.mxu0 0
  %55 = vmatpush1.bf16.msra.mxu0 0
  %56 = vmatprep.subr.bf16.mxu0 0
  %57 = vmatpush1.bf16.msra.mxu0 0
  %58 = vmatprep.subr.bf16.mxu0 0
  %59 = vmatpush1.bf16.msra.mxu0 0
  %60 = vmatprep.subr.bf16.mxu0 0
  %61 = vmatpush1.bf16.msra.mxu0 0
  %62 = vmatprep.subr.bf16.mxu0 0
  %63 = vmatpush1.bf16.msra.mxu0 %v43
  %64 = vmatprep.subr.bf16.mxu0 0
  %65 = vmatpush1.bf16.msra.mxu0 %v42
  %66 = vmatprep.subr.bf16.mxu0 0
  %67 = vmatpush2.bf16.msra.mxu0 0
  %68 = vmatprep.subr.bf16.mxu0 0
  %69 = vmatpush2.bf16.msra.mxu0 0
  %70 = vmatprep.subr.bf16.mxu0 0
  %71 = vmatpush2.bf16.msra.mxu0 0
  %72 = vmatprep.subr.bf16.mxu0 0
  %73 = vmatpush2.bf16.msra.mxu0 0
  %74 = vmatprep.subr.bf16.mxu0 0
  %75 = vmatpush2.bf16.msra.mxu0 0
  %76 = vmatprep.subr.bf16.mxu0 0
  %77 = vmatpush2.bf16.msra.mxu0 0
  %78 = vmatprep.subr.bf16.mxu0 0
  %79 = vmatpush2.bf16.msra.mxu0 0
  %80 = vmatprep.subr.bf16.mxu0 0
  %81 = vmatpush2.bf16.msra.mxu0 0
  %82 = vmatprep.mubr.bf16.mxu0 0
  %83 = vmatmul.mubr.bf16.gmra.mxu0 %v48
  %v84 = vpop.f32.mrf.mxu0
  %v85 = vadd.f32 %v32, %v84
  %v86 = vpop.f32.mrf.mxu0
  %v87 = vpop.f32.mrf.mxu0
  %v88 = vpop.f32.mrf.mxu0
  %89 = vdwg.mxu0
  %v90 = vmax.f32 %v85, 0.0
  %v91 = vpack.c.bf16 %v90, %v90
  %v92 = vld [vmem:[%s3] sm:$0xf]
  %v93 = vld [vmem:[%s3 + $0x4] sm:$0xf]
  %v94 = vld [vmem:[%s3 + $0x8] sm:$0xf]
  %v95 = vld [vmem:[%s3 + $0xc] sm:$0xf]
  %v96 = vld [vmem:[%s3 + $0x10] sm:$0xf]
  %v97 = vld [vmem:[%s3 + $0x14] sm:$0xf]
  %v98 = vld [vmem:[%s3 + $0x18] sm:$0xf]
  %v99 = vld [vmem:[%s3 + $0x1c] sm:$0xf]
  %v100 = vld [vmem:[%s3 + $0x20] sm:$0xf]
  %v101 = vld [vmem:[%s3 + $0x24] sm:$0xf]
  %v102 = vld [vmem:[%s3 + $0x28] sm:$0xf]
  %v103 = vld [vmem:[%s3 + $0x2c] sm:$0xf]
  %v104 = vld [vmem:[%s3 + $0x30] sm:$0xf]
  %v105 = vld [vmem:[%s3 + $0x34] sm:$0xf]
  %v106 = vld [vmem:[%s3 + $0x38] sm:$0xf]
  %v107 = vld [vmem:[%s3 + $0x3c] sm:$0xf]
  %v108 = vld [vmem:[%s4] sm:$0x1]
  %v110 = vlaneseq
  %v111 = vshrl.u32 %v110, 7
  %v112 = vsub.s32 0, %v111
  %v113 = vrot.slane %v108, %v112
  %v131 = vunpack.c.l.b16 %v92
  %v132 = vunpack.c.l.b16 %v93
  %v133 = vunpack.c.l.b16 %v94
  %v134 = vunpack.c.l.b16 %v95
  %v135 = vunpack.c.l.b16 %v96
  %v136 = vunpack.c.l.b16 %v97
  %v137 = vunpack.c.l.b16 %v98
  %v138 = vunpack.c.l.b16 %v99
  %v139 = vunpack.c.l.b16 %v100
  %v140 = vunpack.c.l.b16 %v101
  %v141 = vunpack.c.l.b16 %v102
  %v142 = vunpack.c.l.b16 %v103
  %v143 = vunpack.c.l.b16 %v104
  %v144 = vunpack.c.l.b16 %v105
  %v145 = vunpack.c.l.b16 %v106
  %v146 = vunpack.c.l.b16 %v107
  %v147 = vpack.c.b16 %v132, %v131
  %v148 = vpack.c.b16 %v134, %v133
  %v149 = vpack.c.b16 %v136, %v135
  %v150 = vpack.c.b16 %v138, %v137
  %v151 = vpack.c.b16 %v140, %v139
  %v152 = vpack.c.b16 %v142, %v141
  %v153 = vpack.c.b16 %v144, %v143
  %v154 = vpack.c.b16 %v146, %v145
  %163 = vmatprep.subr.bf16.mxu0 0
  %164 = vmatpush1.bf16.msra.mxu0 %v154
  %165 = vmatprep.subr.bf16.mxu0 0
  %166 = vmatpush1.bf16.msra.mxu0 %v153
  %167 = vmatprep.subr.bf16.mxu0 0
  %168 = vmatpush1.bf16.msra.mxu0 %v152
  %169 = vmatprep.subr.bf16.mxu0 0
  %170 = vmatpush1.bf16.msra.mxu0 %v151
  %171 = vmatprep.subr.bf16.mxu0 0
  %172 = vmatpush1.bf16.msra.mxu0 %v150
  %173 = vmatprep.subr.bf16.mxu0 0
  %174 = vmatpush1.bf16.msra.mxu0 %v149
  %175 = vmatprep.subr.bf16.mxu0 0
  %176 = vmatpush1.bf16.msra.mxu0 %v148
  %177 = vmatprep.subr.bf16.mxu0 0
  %178 = vmatpush1.bf16.msra.mxu0 %v147
  %179 = vmatprep.subr.bf16.mxu0 0
  %180 = vmatpush2.bf16.msra.mxu0 0
  %181 = vmatprep.subr.bf16.mxu0 0
  %182 = vmatpush2.bf16.msra.mxu0 0
  %183 = vmatprep.subr.bf16.mxu0 0
  %184 = vmatpush2.bf16.msra.mxu0 0
  %185 = vmatprep.subr.bf16.mxu0 0
  %186 = vmatpush2.bf16.msra.mxu0 0
  %187 = vmatprep.subr.bf16.mxu0 0
  %188 = vmatpush2.bf16.msra.mxu0 0
  %189 = vmatprep.subr.bf16.mxu0 0
  %190 = vmatpush2.bf16.msra.mxu0 0
  %191 = vmatprep.subr.bf16.mxu0 0
  %192 = vmatpush2.bf16.msra.mxu0 0
  %193 = vmatprep.subr.bf16.mxu0 0
  %194 = vmatpush2.bf16.msra.mxu0 0
  %195 = vmatprep.mubr.bf16.mxu0 0
  %196 = vmatmul.mubr.bf16.gmra.mxu0 %v91
  %v197 = vpop.f32.mrf.mxu0
  %v198 = vadd.f32 %v113, %v197
  %v199 = vpop.f32.mrf.mxu0
  %v200 = vpop.f32.mrf.mxu0
  %v201 = vpop.f32.mrf.mxu0
  %202 = vdwg.mxu0
  %vm203 = vcmask 31744
  %204 = vst.msk [vmem:[%s5] sm:$0xff] %vm203, %v198
  // Predicated region
  $region22: #{tpu_custom_call.1} parent=0 // pred_check
    _
  $region23: #{tpu_custom_call.1} parent=0 // pred_check_branch
    %206 = sbr.rel (0) target = $region25
  $region24: #{tpu_custom_call.1} parent=0 // pred_region
    _
  $region25: #{tpu_custom_call.1} parent=0 // pred_fallthru
    _
  // Predicated region
  $region26: #{tpu_custom_call.1} parent=0 // pred_check
    _
  $region27: #{tpu_custom_call.1} parent=0 // pred_check_branch
    %208 = sbr.rel (0) target = $region29
  $region28: #{tpu_custom_call.1} parent=0 // pred_region
    _
  $region29: #{tpu_custom_call.1} parent=0 // pred_fallthru
    _

</llo_original>
